<compile_context>
chip_gen: v7x
topology: tpu7x:2x2x1
jax: 0.10.0
libtpu: 0.0.40
codegen_flags: <defaults>
</compile_context>

<pallas_src>
import functools

import jax
import jax.numpy as jnp
from jax.experimental import pallas as pl
from jax.experimental.pallas import tpu as pltpu


def _round_up(x, m):
    return (x + m - 1) // m * m


def _mlp_kernel(x_ref, w1_ref, b1_ref, w2_ref, b2_ref, o_ref):
    # Linear1: (TB, Din) @ (Din, H) on the MXU, f32 accumulation.
    x = x_ref[...].astype(w1_ref.dtype)
    h = jnp.dot(x, w1_ref[...], preferred_element_type=jnp.float32)
    h = h + b1_ref[...]            # (1, H) bias broadcasts over the batch tile (VPU)
    h = jnp.maximum(h, 0.0)        # ReLU rides free in the VALU slots
    # Linear2: (TB, H) @ (H, Dout) on the MXU, f32 accumulation.
    out = jnp.dot(h.astype(w2_ref.dtype), w2_ref[...],
                  preferred_element_type=jnp.float32)
    out = out + b2_ref[...]
    o_ref[...] = out.astype(o_ref.dtype)


def prepare_simple_mlp_params(w1, b1, w2, b2, *, param_dtype=jnp.float32):
    """One-time parameter prep (run outside the forward jit).

    Takes PyTorch-convention params (w1: (hidden, in), w2: (out, hidden)),
    transposes them to (in, hidden) / (hidden, out) and zero-pads every
    feature dim up to a multiple of 128 (lane-dense).  Zero padding keeps the
    math exact.  Returns (padded params, original (din, hidden, dout)).
    """
    hidden, din = w1.shape
    dout = w2.shape[0]
    din_p = _round_up(din, 128)
    hid_p = _round_up(hidden, 128)
    dout_p = _round_up(dout, 128)

    w1_t = jnp.zeros((din_p, hid_p), param_dtype).at[:din, :hidden].set(
        w1.T.astype(param_dtype))
    b1_p = jnp.zeros((1, hid_p), jnp.float32).at[0, :hidden].set(
        b1.astype(jnp.float32))
    w2_t = jnp.zeros((hid_p, dout_p), param_dtype).at[:hidden, :dout].set(
        w2.T.astype(param_dtype))
    b2_p = jnp.zeros((1, dout_p), jnp.float32).at[0, :dout].set(
        b2.astype(jnp.float32))
    return (w1_t, b1_p, w2_t, b2_p), (din, hidden, dout)


@functools.partial(jax.jit, static_argnames=("dims",))
def simple_mlp_forward(x, params, dims):
    """x: (B, input_dim) f32/bf16; params from prepare_simple_mlp_params."""
    w1_t, b1, w2_t, b2 = params
    din, hidden, dout = dims
    B = x.shape[0]
    din_p, hid_p = w1_t.shape
    dout_p = w2_t.shape[1]

    # Batch tile: multiple of 8 sublanes; 256 rows amortizes the ~0.35us/step
    # pipeline overhead while keeping the (TB, hid_p) f32 intermediate small
    # in VMEM.
    TB = 256 if B >= 256 else _round_up(max(B, 1), 8)
    B_pad = _round_up(B, TB)

    # Zero-pad x into the lane/sublane-aligned slab the kernel expects.
    x_p = jnp.zeros((B_pad, din_p), x.dtype).at[:B, :din].set(x)

    grid = (B_pad // TB,)

    # Explicit VMEM budget: resident weights + double-buffered x/out tiles +
    # f32 intermediates, with headroom.  Capped at 48 MiB (safe under v7x's
    # 64 MiB physical VMEM); floor of 32 MiB lifts v5e's 16 MiB default.
    itemsize_x = x.dtype.itemsize
    bytes_weights = (w1_t.size * w1_t.dtype.itemsize +
                     w2_t.size * w2_t.dtype.itemsize +
                     b1.size * 4 + b2.size * 4)
    bytes_tiles = 2 * TB * (din_p + dout_p) * itemsize_x     # double-buffered
    bytes_interm = 2 * TB * hid_p * 4                        # f32 h + slack
    vmem_limit = int(min(max(bytes_weights + bytes_tiles + bytes_interm
                             + (4 << 20), 32 << 20), 48 << 20))
    # TODO(synk): if the full padded weights ever exceed this budget (very wide
    # hidden layers), add a K-tiling grid axis with a VMEM accumulator instead
    # of the weight-resident plan used here.

    flops = 2 * B_pad * (din_p * hid_p + hid_p * dout_p)
    bytes_accessed = (x_p.size * itemsize_x + bytes_weights
                      + B_pad * dout_p * itemsize_x)

    out_p = pl.pallas_call(
        _mlp_kernel,
        out_shape=jax.ShapeDtypeStruct((B_pad, dout_p), x.dtype),
        grid_spec=pltpu.PrefetchScalarGridSpec(
            num_scalar_prefetch=0,
            grid=grid,
            in_specs=[
                pl.BlockSpec((TB, din_p), lambda i: (i, 0)),      # streamed per batch tile
                pl.BlockSpec((din_p, hid_p), lambda i: (0, 0)),   # resident weight
                pl.BlockSpec((1, hid_p), lambda i: (0, 0)),       # resident bias
                pl.BlockSpec((hid_p, dout_p), lambda i: (0, 0)),  # resident weight
                pl.BlockSpec((1, dout_p), lambda i: (0, 0)),      # resident bias
            ],
            out_specs=pl.BlockSpec((TB, dout_p), lambda i: (i, 0)),
        ),
        compiler_params=pltpu.CompilerParams(
            dimension_semantics=("parallel",),   # independent batch tiles -> megacore on v7x
            vmem_limit_bytes=vmem_limit,
        ),
        cost_estimate=pl.CostEstimate(
            flops=flops, transcendentals=0, bytes_accessed=bytes_accessed),
    )(x_p, w1_t, b1, w2_t, b2)

    # Slice off the batch / lane padding.
    return out_p[:B, :dout]


def xavier_normal(key, shape, dtype=jnp.float32):
    # PyTorch xavier_normal_: std = gain * sqrt(2 / (fan_in + fan_out)); gain=1.
    fan_out, fan_in = shape
    std = (2.0 / (fan_in + fan_out)) ** 0.5
    return std * jax.random.normal(key, shape, dtype)


if __name__ == "__main__":
    # Small shapes consistent with the module's forward: x is (batch, input_dim).
    # (At these sizes the kernel is overhead-dominated; kept small for a fast
    # correctness check — the tiling pays off at realistic MLP widths.)
    batch, input_dim, hidden_dim, output_dim = 8, 16, 32, 8

    key = jax.random.PRNGKey(0)
    kx, kw1, kw2 = jax.random.split(key, 3)

    x = jax.random.normal(kx, (batch, input_dim), dtype=jnp.float32)

    # Deterministic parameter init mirroring the module's __init__.
    w1 = xavier_normal(kw1, (hidden_dim, input_dim))     # linear1.weight
    b1 = jnp.zeros((hidden_dim,), jnp.float32)           # linear1.bias
    w2 = xavier_normal(kw2, (output_dim, hidden_dim))    # linear2.weight
    b2 = jnp.zeros((output_dim,), jnp.float32)           # linear2.bias

    # One-time transpose + lane-dense padding (use param_dtype=jnp.bfloat16 for
    # MXU-peak inference; f32 here so the strict tolerance check stays valid).
    params, dims = prepare_simple_mlp_params(w1, b1, w2, b2,
                                             param_dtype=jnp.float32)

    out = simple_mlp_forward(x, params, dims)
    out = jax.block_until_ready(out)

    # Reference check in plain JAX (same math as the PyTorch forward).
    ref = jnp.maximum(x @ w1.T + b1, 0.0) @ w2.T + b2
    assert out.shape == (batch, output_dim), out.shape
    assert jnp.allclose(out, ref, atol=1e-5, rtol=1e-5)

    print("KERNEL_OK")
</pallas_src>

<mosaic_0001>
module attributes {stable_mosaic.version = 11 : i64} {
  func.func @_mlp_kernel(%arg0: i32, %arg1: memref<8x128xf32, #tpu.memory_space<vmem>>, %arg2: memref<128x128xf32, #tpu.memory_space<vmem>>, %arg3: memref<1x128xf32, #tpu.memory_space<vmem>>, %arg4: memref<128x128xf32, #tpu.memory_space<vmem>>, %arg5: memref<1x128xf32, #tpu.memory_space<vmem>>, %arg6: memref<8x128xf32, #tpu.memory_space<vmem>>) attributes {dimension_semantics = [#tpu.dimension_semantics<parallel>], iteration_bounds = array<i64: 1>, scalar_prefetch = 0 : i64, scratch_operands = 0 : i64, tpu.core_type = #tpu.core_type<tc>, window_params = [{transform_indices = @transform_0, window_bounds = array<i64: 8, 128>}, {pipeline_mode = #tpu.pipeline_mode<synchronous>, transform_indices = @transform_1, window_bounds = array<i64: 128, 128>}, {pipeline_mode = #tpu.pipeline_mode<synchronous>, transform_indices = @transform_2, window_bounds = array<i64: 1, 128>}, {pipeline_mode = #tpu.pipeline_mode<synchronous>, transform_indices = @transform_3, window_bounds = array<i64: 128, 128>}, {pipeline_mode = #tpu.pipeline_mode<synchronous>, transform_indices = @transform_4, window_bounds = array<i64: 1, 128>}, {transform_indices = @transform_5, window_bounds = array<i64: 8, 128>}]} {
    %c0 = arith.constant 0 : index
    %c0_0 = arith.constant 0 : index
    %0 = vector.load %arg1[%c0, %c0_0] : memref<8x128xf32, #tpu.memory_space<vmem>>, vector<8x128xf32>
    %c0_1 = arith.constant 0 : index
    %c0_2 = arith.constant 0 : index
    %1 = vector.load %arg2[%c0_1, %c0_2] : memref<128x128xf32, #tpu.memory_space<vmem>>, vector<128x128xf32>
    %cst = arith.constant dense<0.000000e+00> : vector<8x128xf32>
    %2 = tpu.matmul %0, %1, %cst {dimension_numbers = #tpu.dot_dimension_numbers<[1], [0], [0], [1], [0, 0, 1, 1], [], []>} : vector<8x128xf32>, vector<128x128xf32>, vector<8x128xf32> -> vector<8x128xf32>
    %c0_3 = arith.constant 0 : index
    %c0_4 = arith.constant 0 : index
    %3 = vector.load %arg3[%c0_3, %c0_4] : memref<1x128xf32, #tpu.memory_space<vmem>>, vector<1x128xf32>
    %4 = vector.broadcast %3 : vector<1x128xf32> to vector<8x128xf32>
    %5 = arith.addf %2, %4 : vector<8x128xf32>
    %cst_5 = arith.constant 0.000000e+00 : f32
    %6 = vector.broadcast %cst_5 : f32 to vector<8x128xf32>
    %7 = arith.maximumf %5, %6 : vector<8x128xf32>
    %c0_6 = arith.constant 0 : index
    %c0_7 = arith.constant 0 : index
    %8 = vector.load %arg4[%c0_6, %c0_7] : memref<128x128xf32, #tpu.memory_space<vmem>>, vector<128x128xf32>
    %cst_8 = arith.constant dense<0.000000e+00> : vector<8x128xf32>
    %9 = tpu.matmul %7, %8, %cst_8 {dimension_numbers = #tpu.dot_dimension_numbers<[1], [0], [0], [1], [0, 0, 1, 1], [], []>} : vector<8x128xf32>, vector<128x128xf32>, vector<8x128xf32> -> vector<8x128xf32>
    %c0_9 = arith.constant 0 : index
    %c0_10 = arith.constant 0 : index
    %10 = vector.load %arg5[%c0_9, %c0_10] : memref<1x128xf32, #tpu.memory_space<vmem>>, vector<1x128xf32>
    %11 = vector.broadcast %10 : vector<1x128xf32> to vector<8x128xf32>
    %12 = arith.addf %9, %11 : vector<8x128xf32>
    %c0_11 = arith.constant 0 : index
    %c0_12 = arith.constant 0 : index
    %13 = vector.load %arg6[%c0_11, %c0_12] : memref<8x128xf32, #tpu.memory_space<vmem>>, vector<8x128xf32>
    tpu.vector_store %arg6[%c0_11, %c0_12], %12 {strides = array<i32>} : memref<8x128xf32, #tpu.memory_space<vmem>>, vector<8x128xf32>,
    return
  }
  func.func @transform_0(%arg0: i32) -> (i32, i32) {
    %c0_i32 = arith.constant 0 : i32
    %c0_i32_0 = arith.constant 0 : i32
    return %arg0, %c0_i32 : i32, i32
  }
  func.func @transform_1(%arg0: i32) -> (i32, i32) {
    %c0_i32 = arith.constant 0 : i32
    %c0_i32_0 = arith.constant 0 : i32
    %c0_i32_1 = arith.constant 0 : i32
    return %c0_i32, %c0_i32_0 : i32, i32
  }
  func.func @transform_2(%arg0: i32) -> (i32, i32) {
    %c0_i32 = arith.constant 0 : i32
    %c0_i32_0 = arith.constant 0 : i32
    %c0_i32_1 = arith.constant 0 : i32
    return %c0_i32, %c0_i32_0 : i32, i32
  }
  func.func @transform_3(%arg0: i32) -> (i32, i32) {
    %c0_i32 = arith.constant 0 : i32
    %c0_i32_0 = arith.constant 0 : i32
    %c0_i32_1 = arith.constant 0 : i32
    return %c0_i32, %c0_i32_0 : i32, i32
  }
  func.func @transform_4(%arg0: i32) -> (i32, i32) {
    %c0_i32 = arith.constant 0 : i32
    %c0_i32_0 = arith.constant 0 : i32
    %c0_i32_1 = arith.constant 0 : i32
    return %c0_i32, %c0_i32_0 : i32, i32
  }
  func.func @transform_5(%arg0: i32) -> (i32, i32) {
    %c0_i32 = arith.constant 0 : i32
    %c0_i32_0 = arith.constant 0 : i32
    return %arg0, %c0_i32 : i32, i32
  }
}

</mosaic_0001>

<llo_original>
// kernel: simple_mlp_forward.1
$region0: #{simple_mlp_forward.1}
  #allocation0 [shape = 'u32[]', space=smem, size = 0x4, offset = 0x4, fixed_abs, tag = 'smem constant byte address 0x4 - core index']
  #allocation1 [shape = 'u32[144,128]{1,0:T(1,128)}', space=vmem, size = 0x12000, scoped, tag = 'internal scratch']
  %s0 = inlined_call_operand.vmem [shape: f32[8,128], index: 0, kind: input, shape index: {}]
  %s1 = inlined_call_operand.hbm [shape: f32[128,128], index: 1, kind: input, shape index: {}]
  %s2 = inlined_call_operand.vmem [shape: f32[1,128], index: 2, kind: input, shape index: {}]
  %s3 = inlined_call_operand.hbm [shape: f32[128,128], index: 3, kind: input, shape index: {}]
  %s4 = inlined_call_operand.vmem [shape: f32[1,128], index: 4, kind: input, shape index: {}]
  %s5 = inlined_call_operand.hbm [shape: f32[8,128], index: 5, kind: output, shape index: {}]
  %s6 = sld [smem:[#allocation0]]
  $region38: #{simple_mlp_forward.1} parent=0
    _
  %s8 = ssub.s32 1, %s6
  %s9 = scalar_select 0, %s8, %s6
  $region1: #{simple_mlp_forward.1} parent=0
    #allocation2 [shape = 'u8[65536]{0}', space=vmem, size = 0x10000, scoped, tag = 'input window, operand 1, single buffered']
    #allocation3 [shape = 's32[1]{0}', space=sflag, size = 0x4, scoped, tag = 'scoped memory for simple_mlp_forward.1']
    #allocation4 [shape = 's32[1]{0}', space=sflag, size = 0x4, scoped, tag = 'scoped memory for simple_mlp_forward.1']
    #allocation5 [shape = 'u8[65536]{0}', space=vmem, size = 0x10000, scoped, tag = 'input window, operand 3, single buffered']
    #allocation6 [shape = 's32[1]{0}', space=sflag, size = 0x4, scoped, tag = 'scoped memory for simple_mlp_forward.1']
    #allocation7 [shape = 'u8[4096]{0}', space=vmem, size = 0x1000, scoped, tag = 'output window, operand 0, single buffered']
    %10 = vsyncpa [#allocation3], 0
    %11 = vsyncpa [#allocation6], 0
    %12 = vsyncpa [#allocation4], 0
    // Predicated region
    $region2: #{simple_mlp_forward.1} parent=1 // pred_check
      _
    $region3: #{simple_mlp_forward.1} parent=1 // pred_check_branch
      %14 = sbr.rel (0) target = $region5
    $region4: #{simple_mlp_forward.1} parent=1 // pred_region
      _
    $region5: #{simple_mlp_forward.1} parent=1 // pred_fallthru
      _
    // Predicated region
    $region6: #{simple_mlp_forward.1} parent=1 // pred_check
      _
    $region7: #{simple_mlp_forward.1} parent=1 // pred_check_branch
      %16 = sbr.rel (0) target = $region9
    $region8: #{simple_mlp_forward.1} parent=1 // pred_region
      %s18 = ssub.s32 2048, 2048
      %19 = vsyncadd [#allocation3], %s18
      %s20 = sshll.u32 [#allocation2], 4
      %s21 = int_to_ptr.vmem [resolvable:$true] %s20
      %26 = dma.hbm_to_vmem [thread:$0]  %s1, 2048, %s21, [#allocation3], 128, 128, 8
    $region9: #{simple_mlp_forward.1} parent=1 // pred_fallthru
      _
    // Predicated region
    $region10: #{simple_mlp_forward.1} parent=1 // pred_check
      _
    $region11: #{simple_mlp_forward.1} parent=1 // pred_check_branch
      %28 = sbr.rel (0) target = $region13
    $region12: #{simple_mlp_forward.1} parent=1 // pred_region
      _
    $region13: #{simple_mlp_forward.1} parent=1 // pred_fallthru
      _
    // Predicated region
    $region14: #{simple_mlp_forward.1} parent=1 // pred_check
      _
    $region15: #{simple_mlp_forward.1} parent=1 // pred_check_branch
      %30 = sbr.rel (0) target = $region17
    $region16: #{simple_mlp_forward.1} parent=1 // pred_region
      %s32 = ssub.s32 2048, 2048
      %33 = vsyncadd [#allocation6], %s32
      %s34 = sshll.u32 [#allocation5], 4
      %s35 = int_to_ptr.vmem [resolvable:$true] %s34
      %40 = dma.hbm_to_vmem [thread:$0]  %s3, 2048, %s35, [#allocation6], 128, 128, 8
    $region17: #{simple_mlp_forward.1} parent=1 // pred_fallthru
      _
    // Predicated region
    $region18: #{simple_mlp_forward.1} parent=1 // pred_check
      _
    $region19: #{simple_mlp_forward.1} parent=1 // pred_check_branch
      %42 = sbr.rel (0) target = $region21
    $region20: #{simple_mlp_forward.1} parent=1 // pred_region
      _
    $region21: #{simple_mlp_forward.1} parent=1 // pred_fallthru
      _
    // Predicated region
    $region22: #{simple_mlp_forward.1} parent=1 // pred_check
      _
    $region23: #{simple_mlp_forward.1} parent=1 // pred_check_branch
      %44 = sbr.rel (0) target = $region25
    $region24: #{simple_mlp_forward.1} parent=1 // pred_region
      %45 = dma.done [#allocation3], 2048
    $region25: #{simple_mlp_forward.1} parent=1 // pred_fallthru
      _
    // Predicated region
    $region26: #{simple_mlp_forward.1} parent=1 // pred_check
      _
    $region27: #{simple_mlp_forward.1} parent=1 // pred_check_branch
      %47 = sbr.rel (0) target = $region29
    $region28: #{simple_mlp_forward.1} parent=1 // pred_region
      %48 = dma.done [#allocation6], 2048
    $region29: #{simple_mlp_forward.1} parent=1 // pred_fallthru
      _
    %v49 = vld [vmem:[%s0] sm:$0xff]
    %v50 = vld [vmem:[#allocation2] sm:$0xff]
    %v51 = vld [vmem:[#allocation2 + $0x8] sm:$0xff]
    %v52 = vld [vmem:[#allocation2 + $0x10] sm:$0xff]
    %v53 = vld [vmem:[#allocation2 + $0x18] sm:$0xff]
    %v54 = vld [vmem:[#allocation2 + $0x20] sm:$0xff]
    %v55 = vld [vmem:[#allocation2 + $0x28] sm:$0xff]
    %v56 = vld [vmem:[#allocation2 + $0x30] sm:$0xff]
    %v57 = vld [vmem:[#allocation2 + $0x38] sm:$0xff]
    %v58 = vld [vmem:[#allocation2 + $0x40] sm:$0xff]
    %v59 = vld [vmem:[#allocation2 + $0x48] sm:$0xff]
    %v60 = vld [vmem:[#allocation2 + $0x50] sm:$0xff]
    %v61 = vld [vmem:[#allocation2 + $0x58] sm:$0xff]
    %v62 = vld [vmem:[#allocation2 + $0x60] sm:$0xff]
    %v63 = vld [vmem:[#allocation2 + $0x68] sm:$0xff]
    %v64 = vld [vmem:[#allocation2 + $0x70] sm:$0xff]
    %v65 = vld [vmem:[#allocation2 + $0x78] sm:$0xff]
    %v66 = vld [vmem:[%s2] sm:$0x1]
    %v68 = vlaneseq
    %v69 = vshrl.u32 %v68, 7
    %v70 = vsub.s32 0, %v69
    %v71 = vrot.slane %v66, %v70
    %73 = vmatprep.subr.mxu0 0.0
    %74 = vmatpush1.msra.mxu0 %v50
    %75 = vmatprep.subr.mxu0 0.0
    %76 = vmatpush1.msra.mxu0 %v51
    %77 = vmatprep.subr.mxu0 0.0
    %78 = vmatpush1.msra.mxu0 %v52
    %79 = vmatprep.subr.mxu0 0.0
    %80 = vmatpush1.msra.mxu0 %v53
    %81 = vmatprep.subr.mxu0 0.0
    %82 = vmatpush1.msra.mxu0 %v54
    %83 = vmatprep.subr.mxu0 0.0
    %84 = vmatpush1.msra.mxu0 %v55
    %85 = vmatprep.subr.mxu0 0.0
    %86 = vmatpush1.msra.mxu0 %v56
    %87 = vmatprep.subr.mxu0 0.0
    %88 = vmatpush1.msra.mxu0 %v57
    %89 = vmatprep.subr.mxu0 0.0
    %90 = vmatpush1.msra.mxu0 %v58
    %91 = vmatprep.subr.mxu0 0.0
    %92 = vmatpush1.msra.mxu0 %v59
    %93 = vmatprep.subr.mxu0 0.0
    %94 = vmatpush1.msra.mxu0 %v60
    %95 = vmatprep.subr.mxu0 0.0
    %96 = vmatpush1.msra.mxu0 %v61
    %97 = vmatprep.subr.mxu0 0.0
    %98 = vmatpush1.msra.mxu0 %v62
    %99 = vmatprep.subr.mxu0 0.0
    %100 = vmatpush1.msra.mxu0 %v63
    %101 = vmatprep.subr.mxu0 0.0
    %102 = vmatpush1.msra.mxu0 %v64
    %103 = vmatprep.subr.mxu0 0.0
    %104 = vmatpush1.msra.mxu0 %v65
    %105 = vmatprep.subr.mxu0 0.0
    %106 = vmatpush1.msra.mxu0 0.0
    %107 = vmatprep.subr.mxu0 0.0
    %108 = vmatpush1.msra.mxu0 0.0
    %109 = vmatprep.subr.mxu0 0.0
    %110 = vmatpush1.msra.mxu0 0.0
    %111 = vmatprep.subr.mxu0 0.0
    %112 = vmatpush1.msra.mxu0 0.0
    %113 = vmatprep.subr.mxu0 0.0
    %114 = vmatpush1.msra.mxu0 0.0
    %115 = vmatprep.subr.mxu0 0.0
    %116 = vmatpush1.msra.mxu0 0.0
    %117 = vmatprep.subr.mxu0 0.0
    %118 = vmatpush1.msra.mxu0 0.0
    %119 = vmatprep.subr.mxu0 0.0
    %120 = vmatpush1.msra.mxu0 0.0
    %121 = vmatprep.subr.mxu0 0.0
    %122 = vmatpush1.msra.mxu0 0.0
    %123 = vmatprep.subr.mxu0 0.0
    %124 = vmatpush1.msra.mxu0 0.0
    %125 = vmatprep.subr.mxu0 0.0
    %126 = vmatpush1.msra.mxu0 0.0
    %127 = vmatprep.subr.mxu0 0.0
    %128 = vmatpush1.msra.mxu0 0.0
    %129 = vmatprep.subr.mxu0 0.0
    %130 = vmatpush1.msra.mxu0 0.0
    %131 = vmatprep.subr.mxu0 0.0
    %132 = vmatpush1.msra.mxu0 0.0
    %133 = vmatprep.subr.mxu0 0.0
    %134 = vmatpush1.msra.mxu0 0.0
    %135 = vmatprep.subr.mxu0 0.0
    %136 = vmatpush1.msra.mxu0 0.0
    %137 = vmatprep.mubr.f32.mxu0 0.0
    %138 = vmatmul.mubr.f32.gmra.mrb[0].mxu0 %v49
    %v139 = vpop.f32.mrb[0].mxu0
    %v140 = vadd.f32 %v71, %v139
    %v141 = vpop.f32.mrb[0].mxu0
    %142 = vdwg.mxu0
    %v143 = vmax.f32 %v140, 0.0
    %v144 = vld [vmem:[#allocation5] sm:$0xff]
    %v145 = vld [vmem:[#allocation5 + $0x8] sm:$0xff]
    %v146 = vld [vmem:[#allocation5 + $0x10] sm:$0xff]
    %v147 = vld [vmem:[#allocation5 + $0x18] sm:$0xff]
    %v148 = vld [vmem:[#allocation5 + $0x20] sm:$0xff]
    %v149 = vld [vmem:[#allocation5 + $0x28] sm:$0xff]
    %v150 = vld [vmem:[#allocation5 + $0x30] sm:$0xff]
    %v151 = vld [vmem:[#allocation5 + $0x38] sm:$0xff]
    %v152 = vld [vmem:[#allocation5 + $0x40] sm:$0xff]
    %v153 = vld [vmem:[#allocation5 + $0x48] sm:$0xff]
    %v154 = vld [vmem:[#allocation5 + $0x50] sm:$0xff]
    %v155 = vld [vmem:[#allocation5 + $0x58] sm:$0xff]
    %v156 = vld [vmem:[#allocation5 + $0x60] sm:$0xff]
    %v157 = vld [vmem:[#allocation5 + $0x68] sm:$0xff]
    %v158 = vld [vmem:[#allocation5 + $0x70] sm:$0xff]
    %v159 = vld [vmem:[#allocation5 + $0x78] sm:$0xff]
    %v160 = vld [vmem:[%s4] sm:$0x1]
    %v162 = vlaneseq
    %v163 = vshrl.u32 %v162, 7
    %v164 = vsub.s32 0, %v163
    %v165 = vrot.slane %v160, %v164
    %167 = vmatprep.subr.mxu0 0.0
    %168 = vmatpush1.msra.mxu0 %v144
    %169 = vmatprep.subr.mxu0 0.0
    %170 = vmatpush1.msra.mxu0 %v145
    %171 = vmatprep.subr.mxu0 0.0
    %172 = vmatpush1.msra.mxu0 %v146
    %173 = vmatprep.subr.mxu0 0.0
    %174 = vmatpush1.msra.mxu0 %v147
    %175 = vmatprep.subr.mxu0 0.0
    %176 = vmatpush1.msra.mxu0 %v148
    %177 = vmatprep.subr.mxu0 0.0
    %178 = vmatpush1.msra.mxu0 %v149
    %179 = vmatprep.subr.mxu0 0.0
    %180 = vmatpush1.msra.mxu0 %v150
    %181 = vmatprep.subr.mxu0 0.0
    %182 = vmatpush1.msra.mxu0 %v151
    %183 = vmatprep.subr.mxu0 0.0
    %184 = vmatpush1.msra.mxu0 %v152
    %185 = vmatprep.subr.mxu0 0.0
    %186 = vmatpush1.msra.mxu0 %v153
    %187 = vmatprep.subr.mxu0 0.0
    %188 = vmatpush1.msra.mxu0 %v154
    %189 = vmatprep.subr.mxu0 0.0
    %190 = vmatpush1.msra.mxu0 %v155
    %191 = vmatprep.subr.mxu0 0.0
    %192 = vmatpush1.msra.mxu0 %v156
    %193 = vmatprep.subr.mxu0 0.0
    %194 = vmatpush1.msra.mxu0 %v157
    %195 = vmatprep.subr.mxu0 0.0
    %196 = vmatpush1.msra.mxu0 %v158
    %197 = vmatprep.subr.mxu0 0.0
    %198 = vmatpush1.msra.mxu0 %v159
    %199 = vmatprep.subr.mxu0 0.0
    %200 = vmatpush1.msra.mxu0 0.0
    %201 = vmatprep.subr.mxu0 0.0
    %202 = vmatpush1.msra.mxu0 0.0
    %203 = vmatprep.subr.mxu0 0.0
    %204 = vmatpush1.msra.mxu0 0.0
    %205 = vmatprep.subr.mxu0 0.0
    %206 = vmatpush1.msra.mxu0 0.0
    %207 = vmatprep.subr.mxu0 0.0
    %208 = vmatpush1.msra.mxu0 0.0
    %209 = vmatprep.subr.mxu0 0.0
    %210 = vmatpush1.msra.mxu0 0.0
    %211 = vmatprep.subr.mxu0 0.0
    %212 = vmatpush1.msra.mxu0 0.0
    %213 = vmatprep.subr.mxu0 0.0
    %214 = vmatpush1.msra.mxu0 0.0
    %215 = vmatprep.subr.mxu0 0.0
    %216 = vmatpush1.msra.mxu0 0.0
    %217 = vmatprep.subr.mxu0 0.0
    %218 = vmatpush1.msra.mxu0 0.0
    %219 = vmatprep.subr.mxu0 0.0
    %220 = vmatpush1.msra.mxu0 0.0
    %221 = vmatprep.subr.mxu0 0.0
    %222 = vmatpush1.msra.mxu0 0.0
    %223 = vmatprep.subr.mxu0 0.0
    %224 = vmatpush1.msra.mxu0 0.0
    %225 = vmatprep.subr.mxu0 0.0
    %226 = vmatpush1.msra.mxu0 0.0
    %227 = vmatprep.subr.mxu0 0.0
    %228 = vmatpush1.msra.mxu0 0.0
    %229 = vmatprep.subr.mxu0 0.0
    %230 = vmatpush1.msra.mxu0 0.0
    %231 = vmatprep.mubr.f32.mxu0 0.0
    %232 = vmatmul.mubr.f32.gmra.mrb[0].mxu0 %v143
    %v233 = vpop.f32.mrb[0].mxu0
    %v234 = vadd.f32 %v165, %v233
    %v235 = vpop.f32.mrb[0].mxu0
    %236 = vdwg.mxu0
    %237 = vst [vmem:[#allocation7] sm:$0xff] %v234
    // Predicated region
    $region30: #{simple_mlp_forward.1} parent=1 // pred_check
      _
    $region31: #{simple_mlp_forward.1} parent=1 // pred_check_branch
      %239 = sbr.rel (0) target = $region33
    $region32: #{simple_mlp_forward.1} parent=1 // pred_region
      %s241 = ssub.s32 128, 128
      %242 = vsyncadd [#allocation4], %s241
      %s244 = sshll.u32 [#allocation7], 4
      %s245 = int_to_ptr.vmem [resolvable:$true] %s244
      %247 = dma.vmem_to_hbm [thread:$0]  %s245, 128, %s5, [#allocation4]
    $region33: #{simple_mlp_forward.1} parent=1 // pred_fallthru
      _
    // Predicated region
    $region34: #{simple_mlp_forward.1} parent=1 // pred_check
      _
    $region35: #{simple_mlp_forward.1} parent=1 // pred_check_branch
      %249 = sbr.rel (0) target = $region37
    $region36: #{simple_mlp_forward.1} parent=1 // pred_region
      %250 = dma.done [#allocation4], 128
    $region37: #{simple_mlp_forward.1} parent=1 // pred_fallthru
      _
    %251 = vsyncpa [#allocation3], 1
    %252 = vsyncpa [#allocation6], 1
    %253 = vsyncpa [#allocation4], 1

</llo_original>
